<compile_context>
chip_gen: v6e
topology: v6e:2x2x1
jax: 0.10.0
libtpu: 0.0.40
codegen_flags: <defaults>
</compile_context>

<pallas_src>
import functools
import math
from typing import NamedTuple

import jax
import jax.numpy as jnp
from jax.experimental import pallas as pl
from jax.experimental.pallas import tpu as pltpu

_LANE = 128
_SUBLANE = 8


class PreparedParams(NamedTuple):
    w1: jax.Array     # (D, hidden)   bf16
    b1: jax.Array     # (1, hidden)   f32
    w2p: jax.Array    # (hidden, cp)  bf16, lane-padded
    b2p: jax.Array    # (1, cp)       f32,  lane-padded
    classes: int      # number of valid columns in w2p/b2p


def prepare_params(params):
    """One-time param prep, hoisted out of the forward (perf review item 1)."""
    w1, b1, w2, b2 = params
    hidden = w1.shape[1]
    classes = w2.shape[1]
    cp = ((classes + _LANE - 1) // _LANE) * _LANE   # lane-dense class dim
    w1b = w1.astype(jnp.bfloat16)
    b1_2d = b1.reshape(1, hidden).astype(jnp.float32)
    w2p = jnp.zeros((hidden, cp), jnp.bfloat16).at[:, :classes].set(
        w2.astype(jnp.bfloat16))
    b2p = jnp.zeros((1, cp), jnp.float32).at[:, :classes].set(
        b2.astype(jnp.float32))
    return PreparedParams(w1b, b1_2d, w2p, b2p, classes)


def _perturbnet_mlp_kernel(x_ref, w1_ref, b1_ref, w2_ref, b2_ref, o_ref,
                           acc_ref, *, reps, batch):
    """K-tiled 2-layer MLP; last K step runs epilogue + single broadcast store."""
    k = pl.program_id(0)

    @pl.when(k == 0)
    def _():
        acc_ref[...] = jnp.zeros_like(acc_ref)

    # First matmul, K tile `k`.  Input tile cast to bf16 in-kernel (VPU has
    # slack under the MXU/DMA); accumulation is f32 in VMEM scratch.
    acc_ref[...] += jnp.dot(x_ref[...].astype(jnp.bfloat16), w1_ref[...],
                            preferred_element_type=jnp.float32)

    @pl.when(k == pl.num_programs(0) - 1)
    def _():
        h = jnp.maximum(acc_ref[...] + b1_ref[...], 0.0)          # f32 epilogue
        o = jnp.dot(h.astype(jnp.bfloat16), w2_ref[...],
                    preferred_element_type=jnp.float32) + b2_ref[...]
        cp = o.shape[-1]
        # PerturbNet's x.repeat(...): the inner net is deterministic per
        # repeat, so store the single result to every repeat slab with ONE
        # unmasked lane-dense store.
        o_ref[...] = jnp.broadcast_to(o[None], (reps, batch, cp)).reshape(
            reps * batch, cp).astype(o_ref.dtype)


def perturbnet_forward(x_nchw, prepared: PreparedParams, *, num_perts=1,
                       pert_type="ffd", training=True):
    """PerturbNet.forward: repeat batch (if training) then run the inner net."""
    w1b, b1_2d, w2p, b2p, classes = prepared
    B = x_nchw.shape[0]
    D = math.prod(x_nchw.shape[1:])
    hidden = w1b.shape[1]
    cp = w2p.shape[1]
    assert w1b.shape[0] == D, "param/input size mismatch"

    if training:
        if "ffd" in pert_type.lower():
            reps = num_perts + 1
        elif "cfd" in pert_type.lower():
            reps = num_perts * 2
        else:
            reps = 1
    else:
        reps = 1

    # Flatten (plain-JAX glue; stays f32 so there is no extra cast round-trip)
    # and pad the batch to a sublane multiple so all stores are unmasked.
    x2d = x_nchw.reshape(B, D)
    Bp = ((B + _SUBLANE - 1) // _SUBLANE) * _SUBLANE
    if Bp != B:
        x2d = jnp.pad(x2d, ((0, Bp - B), (0, 0)))

    # K-reduction tiling over D: bounds resident weight VMEM and lets the
    # BlockSpec pipeline prefetch w1 tile k+1 behind the matmul of tile k.
    tk = 512 if (D > 512 and D % 512 == 0) else D
    num_k = D // tk

    flops = 2 * Bp * D * hidden + 2 * Bp * hidden * cp
    bytes_accessed = (Bp * D * 4 + D * hidden * 2 + hidden * 4
                      + hidden * cp * 2 + cp * 4 + reps * Bp * cp * 4)

    kernel = functools.partial(_perturbnet_mlp_kernel, reps=reps, batch=Bp)

    out = pl.pallas_call(
        kernel,
        out_shape=jax.ShapeDtypeStruct((reps * Bp, cp), jnp.float32),
        grid_spec=pltpu.PrefetchScalarGridSpec(
            num_scalar_prefetch=0,
            grid=(num_k,),                                   # reduction over D
            in_specs=[
                pl.BlockSpec((Bp, tk), lambda k: (0, k)),        # x   (f32)
                pl.BlockSpec((tk, hidden), lambda k: (k, 0)),    # w1  (bf16)
                pl.BlockSpec((1, hidden), lambda k: (0, 0)),     # b1  (f32)
                pl.BlockSpec((hidden, cp), lambda k: (0, 0)),    # w2p (bf16)
                pl.BlockSpec((1, cp), lambda k: (0, 0)),         # b2p (f32)
            ],
            out_specs=pl.BlockSpec((reps * Bp, cp), lambda k: (0, 0)),
            scratch_shapes=[pltpu.VMEM((Bp, hidden), jnp.float32)],
        ),
        compiler_params=pltpu.CompilerParams(
            dimension_semantics=("arbitrary",),
            # Explicit VMEM budget: trivially satisfied at these shapes, but
            # keeps the kernel portable to v7x (64 MiB physical / 32 MiB
            # scoped default) as D/hidden grow with the K tiling above.
            vmem_limit_bytes=32 * 1024 * 1024,
        ),
        cost_estimate=pl.CostEstimate(
            flops=flops, transcendentals=0, bytes_accessed=bytes_accessed),
    )(x2d, w1b, b1_2d, w2p, b2p)

    # Drop batch padding and lane padding (plain-JAX glue; fuses downstream).
    out = out.reshape(reps, Bp, cp)[:, :B, :classes]
    return out.reshape(reps * B, classes)


def init_params(key, D, hidden, classes, dtype=jnp.float32):
    k1, k2, k3, k4 = jax.random.split(key, 4)
    w1 = jax.random.normal(k1, (D, hidden), dtype) * (1.0 / D) ** 0.5
    b1 = jax.random.normal(k2, (hidden,), dtype) * 0.01
    w2 = jax.random.normal(k3, (hidden, classes), dtype) * (1.0 / hidden) ** 0.5
    b2 = jax.random.normal(k4, (classes,), dtype) * 0.01
    return w1, b1, w2, b2


if __name__ == "__main__":
    # Small NCHW conv-style input; D = 1024 exercises the 2-step K grid.
    B, C, H, W = 8, 4, 16, 16
    D = C * H * W            # 1024 -> two K tiles of 512
    HIDDEN = 128
    CLASSES = 16
    NUM_PERTS = 3            # 'ffd' -> repeat factor = num_perts + 1 = 4

    key = jax.random.PRNGKey(0)
    kx, kp = jax.random.split(key)
    x = jax.random.normal(kx, (B, C, H, W), jnp.float32)
    params = init_params(kp, D, HIDDEN, CLASSES)

    # Hoisted, one-time param prep; reused across forward calls.
    prepared = prepare_params(params)

    out = perturbnet_forward(x, prepared, num_perts=NUM_PERTS,
                             pert_type="ffd", training=True)
    out = jax.block_until_ready(out)

    reps = NUM_PERTS + 1
    w1, b1, w2, b2 = params

    # Reference mirroring the kernel's bf16-operand / f32-accumulate numerics.
    xb = x.reshape(B, D).astype(jnp.bfloat16)
    h_ref = jnp.maximum(
        jnp.dot(xb, w1.astype(jnp.bfloat16),
                preferred_element_type=jnp.float32) + b1, 0.0)
    o_ref = jnp.dot(h_ref.astype(jnp.bfloat16), w2.astype(jnp.bfloat16),
                    preferred_element_type=jnp.float32) + b2
    ref_bf16 = jnp.tile(o_ref, (reps, 1))

    # Full-f32 PyTorch-style reference of PerturbNet.forward (training, 'ffd').
    x2d_f32 = jnp.tile(x.reshape(B, D), (reps, 1))
    ref_f32 = jnp.maximum(x2d_f32 @ w1 + b1, 0.0) @ w2 + b2

    assert out.shape == (reps * B, CLASSES)
    assert jnp.allclose(out, ref_bf16, atol=2e-3, rtol=2e-3)
    assert jnp.allclose(out, ref_f32, atol=5e-2, rtol=5e-2)
    print("KERNEL_OK")
</pallas_src>

<mosaic_0001>
module attributes {stable_mosaic.version = 11 : i64} {
  func.func @_perturbnet_mlp_kernel(%arg0: i32, %arg1: memref<8x512xf32, #tpu.memory_space<vmem>>, %arg2: memref<512x128xbf16, #tpu.memory_space<vmem>>, %arg3: memref<1x128xf32, #tpu.memory_space<vmem>>, %arg4: memref<128x128xbf16, #tpu.memory_space<vmem>>, %arg5: memref<1x128xf32, #tpu.memory_space<vmem>>, %arg6: memref<32x128xf32, #tpu.memory_space<vmem>>, %arg7: memref<8x128xf32, #tpu.memory_space<vmem>>) attributes {dimension_semantics = [#tpu.dimension_semantics<arbitrary>], iteration_bounds = array<i64: 2>, scalar_prefetch = 0 : i64, scratch_operands = 1 : i64, tpu.core_type = #tpu.core_type<tc>, window_params = [{transform_indices = @transform_0, window_bounds = array<i64: 8, 512>}, {transform_indices = @transform_1, window_bounds = array<i64: 512, 128>}, {pipeline_mode = #tpu.pipeline_mode<synchronous>, transform_indices = @transform_2, window_bounds = array<i64: 1, 128>}, {pipeline_mode = #tpu.pipeline_mode<synchronous>, transform_indices = @transform_3, window_bounds = array<i64: 128, 128>}, {pipeline_mode = #tpu.pipeline_mode<synchronous>, transform_indices = @transform_4, window_bounds = array<i64: 1, 128>}, {pipeline_mode = #tpu.pipeline_mode<synchronous>, transform_indices = @transform_5, window_bounds = array<i64: 32, 128>}]} {
    %c0_i32 = arith.constant 0 : i32
    %0 = arith.cmpi eq, %arg0, %c0_i32 : i32
    %1 = arith.extui %0 : i1 to i32
    %c0_i32_0 = arith.constant 0 : i32
    %2 = arith.cmpi ne, %1, %c0_i32_0 : i32
    scf.if %2 {
      %cst_9 = arith.constant 0.000000e+00 : f32
      %13 = vector.broadcast %cst_9 : f32 to vector<8x128xf32>
      %c0_10 = arith.constant 0 : index
      %c0_11 = arith.constant 0 : index
      %14 = vector.load %arg7[%c0_10, %c0_11] : memref<8x128xf32, #tpu.memory_space<vmem>>, vector<8x128xf32>
      tpu.vector_store %arg7[%c0_10, %c0_11], %13 {strides = array<i32>} : memref<8x128xf32, #tpu.memory_space<vmem>>, vector<8x128xf32>,
    } else {
    }
    %c0 = arith.constant 0 : index
    %c0_1 = arith.constant 0 : index
    %3 = vector.load %arg7[%c0, %c0_1] : memref<8x128xf32, #tpu.memory_space<vmem>>, vector<8x128xf32>
    %c0_2 = arith.constant 0 : index
    %c0_3 = arith.constant 0 : index
    %4 = vector.load %arg1[%c0_2, %c0_3] : memref<8x512xf32, #tpu.memory_space<vmem>>, vector<8x512xf32>
    %5 = arith.truncf %4 : vector<8x512xf32> to vector<8x512xbf16>
    %c0_4 = arith.constant 0 : index
    %c0_5 = arith.constant 0 : index
    %6 = vector.load %arg2[%c0_4, %c0_5] : memref<512x128xbf16, #tpu.memory_space<vmem>>, vector<512x128xbf16>
    %cst = arith.constant dense<0.000000e+00> : vector<8x128xf32>
    %7 = tpu.matmul %5, %6, %cst {dimension_numbers = #tpu.dot_dimension_numbers<[1], [0], [0], [1], [0, 0, 1, 1], [], []>} : vector<8x512xbf16>, vector<512x128xbf16>, vector<8x128xf32> -> vector<8x128xf32>
    %8 = arith.addf %3, %7 : vector<8x128xf32>
    %c0_6 = arith.constant 0 : index
    %c0_7 = arith.constant 0 : index
    %9 = vector.load %arg7[%c0_6, %c0_7] : memref<8x128xf32, #tpu.memory_space<vmem>>, vector<8x128xf32>
    tpu.vector_store %arg7[%c0_6, %c0_7], %8 {strides = array<i32>} : memref<8x128xf32, #tpu.memory_space<vmem>>, vector<8x128xf32>,
    %c1_i32 = arith.constant 1 : i32
    %10 = arith.cmpi eq, %arg0, %c1_i32 : i32
    %11 = arith.extui %10 : i1 to i32
    %c0_i32_8 = arith.constant 0 : i32
    %12 = arith.cmpi ne, %11, %c0_i32_8 : i32
    scf.if %12 {
      %c0_9 = arith.constant 0 : index
      %c0_10 = arith.constant 0 : index
      %13 = vector.load %arg7[%c0_9, %c0_10] : memref<8x128xf32, #tpu.memory_space<vmem>>, vector<8x128xf32>
      %c0_11 = arith.constant 0 : index
      %c0_12 = arith.constant 0 : index
      %14 = vector.load %arg3[%c0_11, %c0_12] : memref<1x128xf32, #tpu.memory_space<vmem>>, vector<1x128xf32>
      %15 = vector.broadcast %14 : vector<1x128xf32> to vector<8x128xf32>
      %16 = arith.addf %13, %15 : vector<8x128xf32>
      %cst_13 = arith.constant 0.000000e+00 : f32
      %17 = vector.broadcast %cst_13 : f32 to vector<8x128xf32>
      %18 = arith.maximumf %16, %17 : vector<8x128xf32>
      %19 = arith.truncf %18 : vector<8x128xf32> to vector<8x128xbf16>
      %c0_14 = arith.constant 0 : index
      %c0_15 = arith.constant 0 : index
      %20 = vector.load %arg4[%c0_14, %c0_15] : memref<128x128xbf16, #tpu.memory_space<vmem>>, vector<128x128xbf16>
      %cst_16 = arith.constant dense<0.000000e+00> : vector<8x128xf32>
      %21 = tpu.matmul %19, %20, %cst_16 {dimension_numbers = #tpu.dot_dimension_numbers<[1], [0], [0], [1], [0, 0, 1, 1], [], []>} : vector<8x128xbf16>, vector<128x128xbf16>, vector<8x128xf32> -> vector<8x128xf32>
      %c0_17 = arith.constant 0 : index
      %c0_18 = arith.constant 0 : index
      %22 = vector.load %arg5[%c0_17, %c0_18] : memref<1x128xf32, #tpu.memory_space<vmem>>, vector<1x128xf32>
      %23 = vector.broadcast %22 : vector<1x128xf32> to vector<8x128xf32>
      %24 = arith.addf %21, %23 : vector<8x128xf32>
      %25 = vector.shape_cast %24 : vector<8x128xf32> to vector<1x8x128xf32>
      %26 = vector.shape_cast %25 : vector<1x8x128xf32> to vector<1x8x128xf32>
      %27 = vector.broadcast %26 : vector<1x8x128xf32> to vector<4x8x128xf32>
      %28 = vector.shape_cast %27 : vector<4x8x128xf32> to vector<32x128xf32>
      %c0_19 = arith.constant 0 : index
      %c0_20 = arith.constant 0 : index
      %29 = vector.load %arg6[%c0_19, %c0_20] : memref<32x128xf32, #tpu.memory_space<vmem>>, vector<32x128xf32>
      tpu.vector_store %arg6[%c0_19, %c0_20], %28 {strides = array<i32>} : memref<32x128xf32, #tpu.memory_space<vmem>>, vector<32x128xf32>,
    } else {
    }
    return
  }
  func.func @transform_0(%arg0: i32) -> (i32, i32) {
    %c0_i32 = arith.constant 0 : i32
    %c0_i32_0 = arith.constant 0 : i32
    return %c0_i32, %arg0 : i32, i32
  }
  func.func @transform_1(%arg0: i32) -> (i32, i32) {
    %c0_i32 = arith.constant 0 : i32
    %c0_i32_0 = arith.constant 0 : i32
    return %arg0, %c0_i32 : i32, i32
  }
  func.func @transform_2(%arg0: i32) -> (i32, i32) {
    %c0_i32 = arith.constant 0 : i32
    %c0_i32_0 = arith.constant 0 : i32
    %c0_i32_1 = arith.constant 0 : i32
    return %c0_i32, %c0_i32_0 : i32, i32
  }
  func.func @transform_3(%arg0: i32) -> (i32, i32) {
    %c0_i32 = arith.constant 0 : i32
    %c0_i32_0 = arith.constant 0 : i32
    %c0_i32_1 = arith.constant 0 : i32
    return %c0_i32, %c0_i32_0 : i32, i32
  }
  func.func @transform_4(%arg0: i32) -> (i32, i32) {
    %c0_i32 = arith.constant 0 : i32
    %c0_i32_0 = arith.constant 0 : i32
    %c0_i32_1 = arith.constant 0 : i32
    return %c0_i32, %c0_i32_0 : i32, i32
  }
  func.func @transform_5(%arg0: i32) -> (i32, i32) {
    %c0_i32 = arith.constant 0 : i32
    %c0_i32_0 = arith.constant 0 : i32
    %c0_i32_1 = arith.constant 0 : i32
    return %c0_i32, %c0_i32_0 : i32, i32
  }
}

</mosaic_0001>

<llo_original>
// kernel: tpu_custom_call.1
$region0: #{tpu_custom_call.1}
  #allocation0 [shape = 'u32[]', space=smem, size = 0x4, offset = 0x4, fixed_abs, tag = 'smem constant byte address 0x4 - core index']
  #allocation1 [shape = 'u32[144,128]{1,0:T(1,128)}', space=vmem, size = 0x12000, scoped, tag = 'internal scratch']
  #allocation2 [shape = 'f32[8,128]{1,0:T(8,128)}', space=vmem, size = 0x1000, scoped, tag = 'scratch operand']
  %s0 = inlined_call_operand.hbm [shape: f32[8,1024], index: 0, kind: input, shape index: {}]
  %s1 = inlined_call_operand.hbm [shape: bf16[1024,128], index: 1, kind: input, shape index: {}]
  %s2 = inlined_call_operand.vmem [shape: f32[1,128], index: 2, kind: input, shape index: {}]
  %s3 = inlined_call_operand.hbm [shape: bf16[128,128], index: 3, kind: input, shape index: {}]
  %s4 = inlined_call_operand.vmem [shape: f32[1,128], index: 4, kind: input, shape index: {}]
  %s5 = inlined_call_operand.hbm [shape: f32[32,128], index: 5, kind: output, shape index: {}]
  %s6 = sld [smem:[#allocation0]]
  $region73: #{tpu_custom_call.1} parent=0
    _
  %s8 = ssub.s32 1, %s6
  %s9 = scalar_select 0, %s8, %s6
  $region1: #{tpu_custom_call.1} parent=0
    #allocation3 [shape = 'u8[32768]{0}', space=vmem, size = 0x8000, scoped, tag = 'input window, operand 0']
    #allocation4 [shape = 's32[2]{0}', space=sflag, size = 0x8, scoped, tag = 'scoped memory for tpu_custom_call.1']
    #allocation5 [shape = 's32[2]{0}', space=sflag, size = 0x8, scoped, tag = 'scoped memory for tpu_custom_call.1']
    #allocation6 [shape = 'u8[262144]{0}', space=vmem, size = 0x40000, scoped, tag = 'input window, operand 1']
    #allocation7 [shape = 's32[2]{0}', space=sflag, size = 0x8, scoped, tag = 'scoped memory for tpu_custom_call.1']
    #allocation8 [shape = 'u8[32768]{0}', space=vmem, size = 0x8000, scoped, tag = 'input window, operand 3, single buffered']
    #allocation9 [shape = 'u8[16384]{0}', space=vmem, size = 0x4000, scoped, tag = 'output window, operand 0, single buffered']
    %10 = vsyncpa [#allocation4], 0
    %s11 = scalar_lea.sflag [#allocation4], 1
    %12 = vsyncpa %s11, 0
    %13 = vsyncpa [#allocation7], 0
    %s14 = scalar_lea.sflag [#allocation7], 1
    %15 = vsyncpa %s14, 0
    %16 = vsyncpa [#allocation5], 0
    loop: start=0, step=1, limit=4
    $region2: #{tpu_custom_call.1} parent=1 // loop_pre_header
      _
    $region3: #{tpu_custom_call.1} parent=1 // loop_header
      %s18 = sphi 0, %s22
      %p19 = scmp.ge.s32.totalorder %s18, 4
      %s28 = sphi 0, %s30
      %s31 = sphi 0, %s28
      %s32 = sphi 0, %s31
      %s48 = sphi 0, %s32
      %s54 = sphi 0, %s56
      %s57 = sphi 0, %s54
      %s58 = sphi 0, %s57
      %s74 = sphi 0, %s58
      %s78 = sphi 0, %s78
      %s80 = sphi 0, %s78
      %s81 = sphi 0, %s80
      %s95 = sphi 0, %s81
      %s99 = sphi 0, %s99
      %s101 = sphi 0, %s99
      %s102 = sphi 0, %s101
      %s116 = sphi 0, %s102
      %s120 = sphi 0, %s120
      %s122 = sphi 0, %s120
      %s123 = sphi 0, %s122
      %s137 = sphi 0, %s123
      %s141 = sphi 0, %s141
      %s143 = sphi 0, %s141
      %s144 = sphi 0, %s143
      %s158 = sphi 0, %s144
    $region4: #{tpu_custom_call.1} parent=1 // loop_header_branch
      %21 = sbr.rel (%p19) target = $region8
    $region5: #{tpu_custom_call.1} parent=1 // loop_body
      %s23 = ssub.s32 %s18, 1
      %s24 = ssub.s32 %s18, 2
      %s25 = sadd.s32 %s18, 1
      %s26 = ssub.s32 %s18, %s25
      %p27 = scmp.eq.s32.totalorder %s26, 0
      %s29 = sadd.s32 %s28, 1
      %s30 = scalar_select %p27, %s28, %s29
      %p33 = pneg %p27
      %p34 = scmp.eq.s32.totalorder %s18, 1
      %p35 = por %p33, %p34
      %p36 = scmp.ne.s32.totalorder %s28, %s31
      %p37 = scmp.eq.s32.totalorder %s18, 0
      %p38 = por %p36, %p37
      %p39 = scmp.ne.s32.totalorder %s28, %s31
      %p40 = scmp.eq.s32.totalorder %s23, 1
      %p41 = por %p39, %p40
      %p42 = scmp.ne.s32.totalorder %s31, %s32
      %p43 = scmp.eq.s32.totalorder %s23, 0
      %p44 = por %p42, %p43
      %p45 = scmp.ne.s32.totalorder %s31, %s32
      %p46 = scmp.eq.s32.totalorder %s24, 1
      %p47 = por %p45, %p46
      %p49 = scmp.ne.s32.totalorder %s32, %s48
      %p50 = scmp.eq.s32.totalorder %s24, 0
      %p51 = por %p49, %p50
      %s52 = ssub.s32 %s18, %s25
      %p53 = scmp.eq.s32.totalorder %s52, 0
      %s55 = sadd.s32 %s54, 1
      %s56 = scalar_select %p53, %s54, %s55
      %p59 = pneg %p53
      %p60 = scmp.eq.s32.totalorder %s18, 1
      %p61 = por %p59, %p60
      %p62 = scmp.ne.s32.totalorder %s54, %s57
      %p63 = scmp.eq.s32.totalorder %s18, 0
      %p64 = por %p62, %p63
      %p65 = scmp.ne.s32.totalorder %s54, %s57
      %p66 = scmp.eq.s32.totalorder %s23, 1
      %p67 = por %p65, %p66
      %p68 = scmp.ne.s32.totalorder %s57, %s58
      %p69 = scmp.eq.s32.totalorder %s23, 0
      %p70 = por %p68, %p69
      %p71 = scmp.ne.s32.totalorder %s57, %s58
      %p72 = scmp.eq.s32.totalorder %s24, 1
      %p73 = por %p71, %p72
      %p75 = scmp.ne.s32.totalorder %s58, %s74
      %p76 = scmp.eq.s32.totalorder %s24, 0
      %p77 = por %p75, %p76
      %s79 = sadd.s32 %s78, 1
      %p82 = scmp.eq.s32.totalorder %s18, 1
      %p83 = scmp.ne.s32.totalorder %s78, %s80
      %p84 = scmp.eq.s32.totalorder %s18, 0
      %p85 = por %p83, %p84
      %p86 = scmp.ne.s32.totalorder %s78, %s80
      %p87 = scmp.eq.s32.totalorder %s23, 1
      %p88 = por %p86, %p87
      %p89 = scmp.ne.s32.totalorder %s80, %s81
      %p90 = scmp.eq.s32.totalorder %s23, 0
      %p91 = por %p89, %p90
      %p92 = scmp.ne.s32.totalorder %s80, %s81
      %p93 = scmp.eq.s32.totalorder %s24, 1
      %p94 = por %p92, %p93
      %p96 = scmp.ne.s32.totalorder %s81, %s95
      %p97 = scmp.eq.s32.totalorder %s24, 0
      %p98 = por %p96, %p97
      %s100 = sadd.s32 %s99, 1
      %p103 = scmp.eq.s32.totalorder %s18, 1
      %p104 = scmp.ne.s32.totalorder %s99, %s101
      %p105 = scmp.eq.s32.totalorder %s18, 0
      %p106 = por %p104, %p105
      %p107 = scmp.ne.s32.totalorder %s99, %s101
      %p108 = scmp.eq.s32.totalorder %s23, 1
      %p109 = por %p107, %p108
      %p110 = scmp.ne.s32.totalorder %s101, %s102
      %p111 = scmp.eq.s32.totalorder %s23, 0
      %p112 = por %p110, %p111
      %p113 = scmp.ne.s32.totalorder %s101, %s102
      %p114 = scmp.eq.s32.totalorder %s24, 1
      %p115 = por %p113, %p114
      %p117 = scmp.ne.s32.totalorder %s102, %s116
      %p118 = scmp.eq.s32.totalorder %s24, 0
      %p119 = por %p117, %p118
      %s121 = sadd.s32 %s120, 1
      %p124 = scmp.eq.s32.totalorder %s18, 1
      %p125 = scmp.ne.s32.totalorder %s120, %s122
      %p126 = scmp.eq.s32.totalorder %s18, 0
      %p127 = por %p125, %p126
      %p128 = scmp.ne.s32.totalorder %s120, %s122
      %p129 = scmp.eq.s32.totalorder %s23, 1
      %p130 = por %p128, %p129
      %p131 = scmp.ne.s32.totalorder %s122, %s123
      %p132 = scmp.eq.s32.totalorder %s23, 0
      %p133 = por %p131, %p132
      %p134 = scmp.ne.s32.totalorder %s122, %s123
      %p135 = scmp.eq.s32.totalorder %s24, 1
      %p136 = por %p134, %p135
      %p138 = scmp.ne.s32.totalorder %s123, %s137
      %p139 = scmp.eq.s32.totalorder %s24, 0
      %p140 = por %p138, %p139
      %s142 = sadd.s32 %s141, 1
      %p145 = scmp.eq.s32.totalorder %s18, 1
      %p146 = scmp.ne.s32.totalorder %s141, %s143
      %p147 = scmp.eq.s32.totalorder %s18, 0
      %p148 = por %p146, %p147
      %p149 = scmp.ne.s32.totalorder %s141, %s143
      %p150 = scmp.eq.s32.totalorder %s23, 1
      %p151 = por %p149, %p150
      %p152 = scmp.ne.s32.totalorder %s143, %s144
      %p153 = scmp.eq.s32.totalorder %s23, 0
      %p154 = por %p152, %p153
      %p155 = scmp.ne.s32.totalorder %s143, %s144
      %p156 = scmp.eq.s32.totalorder %s24, 1
      %p157 = por %p155, %p156
      %p159 = scmp.ne.s32.totalorder %s144, %s158
      %p160 = scmp.eq.s32.totalorder %s24, 0
      %p161 = por %p159, %p160
      %p162 = scmp.le.s32.totalorder 1, %s18
      %p163 = scmp.lt.s32.totalorder %s18, 3
      %p164 = pnand %p162, %p163
      %p165 = pneg %p164
      // Predicated region
      $region9: #{tpu_custom_call.1} parent=5 // pred_check
        _
      $region10: #{tpu_custom_call.1} parent=5 // pred_check_branch
        %167 = sbr.rel (%p164) target = $region12
      $region11: #{tpu_custom_call.1} parent=5 // pred_region
        %s168 = ssub.s32 %s18, 1
        // Predicated region
        $region13: #{tpu_custom_call.1} parent=11 // pred_check
          %p169 = pneg %p91
        $region14: #{tpu_custom_call.1} parent=11 // pred_check_branch
          %171 = sbr.rel (%p169) target = $region16
        $region15: #{tpu_custom_call.1} parent=11 // pred_region
          _
        $region16: #{tpu_custom_call.1} parent=11 // pred_fallthru
          _
        // Predicated region
        $region17: #{tpu_custom_call.1} parent=11 // pred_check
          %p172 = pneg %p112
        $region18: #{tpu_custom_call.1} parent=11 // pred_check_branch
          %174 = sbr.rel (%p172) target = $region20
        $region19: #{tpu_custom_call.1} parent=11 // pred_region
          %s176 = ssub.s32 1024, 1024
          %177 = vsyncadd [#allocation7], %s176
          %s178 = sshll.u32 [#allocation8], 4
          %s179 = int_to_ptr.vmem [resolvable:$true] %s178
          %184 = dma.hbm_to_vmem [thread:$0]  %s3, 1024, %s179, [#allocation7], 64, 64, 4
        $region20: #{tpu_custom_call.1} parent=11 // pred_fallthru
          _
        // Predicated region
        $region21: #{tpu_custom_call.1} parent=11 // pred_check
          %p185 = pneg %p133
        $region22: #{tpu_custom_call.1} parent=11 // pred_check_branch
          %187 = sbr.rel (%p185) target = $region24
        $region23: #{tpu_custom_call.1} parent=11 // pred_region
          _
        $region24: #{tpu_custom_call.1} parent=11 // pred_fallthru
          _
      $region12: #{tpu_custom_call.1} parent=5 // pred_fallthru
        _
      %p188 = scmp.lt.s32.totalorder %s18, 2
      // Predicated region
      $region25: #{tpu_custom_call.1} parent=5 // pred_check
        %p189 = pneg %p188
      $region26: #{tpu_custom_call.1} parent=5 // pred_check_branch
        %191 = sbr.rel (%p189) target = $region28
      $region27: #{tpu_custom_call.1} parent=5 // pred_region
        // Predicated region
        $region29: #{tpu_custom_call.1} parent=27 // pred_check
          %p192 = pneg %p38
        $region30: #{tpu_custom_call.1} parent=27 // pred_check_branch
          %194 = sbr.rel (%p192) target = $region32
        $region31: #{tpu_custom_call.1} parent=27 // pred_region
          %s195 = sand.u32 %s28, 1
          %s196 = scalar_lea.sflag [#allocation4], %s195
          %s197 = sand.u32 %s28, 1
          %s198 = smul.addr %s197, 32
          %s199 = scalar_lea.vmem [#allocation3], %s198
          %s200 = smul.u32 4, %s18
          %s202 = ssub.s32 512, 512
          %203 = vsyncadd %s196, %s202
          %s204 = smul.addr %s200, 128
          %s205 = scalar_lea.hbm %s0, %s204
          %s207 = sshll.u32 %s199, 4
          %s208 = int_to_ptr.vmem [resolvable:$true] %s207
          %210 = dma.hbm_to_vmem [thread:$0]  %s205, 512, %s208, %s196
        $region32: #{tpu_custom_call.1} parent=27 // pred_fallthru
          _
        // Predicated region
        $region33: #{tpu_custom_call.1} parent=27 // pred_check
          %p211 = pneg %p64
        $region34: #{tpu_custom_call.1} parent=27 // pred_check_branch
          %213 = sbr.rel (%p211) target = $region36
        $region35: #{tpu_custom_call.1} parent=27 // pred_region
          %s214 = sand.u32 %s18, 1
          %s215 = scalar_lea.sflag [#allocation7], %s214
          %s216 = sand.u32 %s54, 1
          %s217 = smul.addr %s216, 256
          %s218 = scalar_lea.vmem [#allocation6], %s217
          %s219 = smul.u32 64, %s18
          %s221 = ssub.s32 4096, 4096
          %222 = vsyncadd %s215, %s221
          %s223 = smul.addr %s219, 64
          %s224 = scalar_lea.hbm %s1, %s223
          %s225 = sshll.u32 %s218, 4
          %s226 = int_to_ptr.vmem [resolvable:$true] %s225
          %231 = dma.hbm_to_vmem [thread:$0]  %s224, 4096, %s226, %s215, 64, 64, 4
        $region36: #{tpu_custom_call.1} parent=27 // pred_fallthru
          _
      $region28: #{tpu_custom_call.1} parent=5 // pred_fallthru
        _
      %p232 = scmp.le.s32.totalorder 1, %s18
      %p233 = scmp.lt.s32.totalorder %s18, 3
      %p234 = pnand %p232, %p233
      %p235 = pneg %p234
      // Predicated region
      $region37: #{tpu_custom_call.1} parent=5 // pred_check
        _
      $region38: #{tpu_custom_call.1} parent=5 // pred_check_branch
        %237 = sbr.rel (%p234) target = $region40
      $region39: #{tpu_custom_call.1} parent=5 // pred_region
        %s238 = ssub.s32 %s18, 1
        %s239 = sand.u32 %s31, 1
        %s240 = scalar_lea.sflag [#allocation4], %s239
        %s241 = sand.u32 %s31, 1
        %s242 = smul.addr %s241, 32
        %s243 = scalar_lea.vmem [#allocation3], %s242
        // Predicated region
        $region41: #{tpu_custom_call.1} parent=39 // pred_check
          %p244 = pneg %p44
        $region42: #{tpu_custom_call.1} parent=39 // pred_check_branch
          %246 = sbr.rel (%p244) target = $region44
        $region43: #{tpu_custom_call.1} parent=39 // pred_region
          %247 = dma.done %s240, 512
        $region44: #{tpu_custom_call.1} parent=39 // pred_fallthru
          _
        %s248 = sand.u32 %s23, 1
        %s249 = scalar_lea.sflag [#allocation7], %s248
        %s250 = sand.u32 %s57, 1
        %s251 = smul.addr %s250, 256
        %s252 = scalar_lea.vmem [#allocation6], %s251
        // Predicated region
        $region45: #{tpu_custom_call.1} parent=39 // pred_check
          %p253 = pneg %p70
        $region46: #{tpu_custom_call.1} parent=39 // pred_check_branch
          %255 = sbr.rel (%p253) target = $region48
        $region47: #{tpu_custom_call.1} parent=39 // pred_region
          %256 = dma.done %s249, 4096
        $region48: #{tpu_custom_call.1} parent=39 // pred_fallthru
          _
        // Predicated region
        $region49: #{tpu_custom_call.1} parent=39 // pred_check
          %p257 = pneg %p112
        $region50: #{tpu_custom_call.1} parent=39 // pred_check_branch
          %259 = sbr.rel (%p257) target = $region52
        $region51: #{tpu_custom_call.1} parent=39 // pred_region
          %260 = dma.done [#allocation7], 1024
        $region52: #{tpu_custom_call.1} parent=39 // pred_fallthru
          _
        %s261 = sand.u32 %s31, 1
        %s262 = scalar_lea.sflag [#allocation4], %s261
        %s263 = sand.u32 %s31, 1
        %s264 = smul.addr %s263, 32
        %s265 = scalar_lea.vmem [#allocation3], %s264
        %p266 = pneg %p44
        %p267 = pneg %p41
        %s268 = sand.u32 %s23, 1
        %s269 = scalar_lea.sflag [#allocation7], %s268
        %s270 = sand.u32 %s57, 1
        %s271 = smul.addr %s270, 256
        %s272 = scalar_lea.vmem [#allocation6], %s271
        %p273 = pneg %p70
        %p274 = pneg %p67
        %p275 = pneg %p91
        %p276 = pneg %p88
        %p277 = pneg %p112
        %p278 = pneg %p109
        %p279 = pneg %p133
        %p280 = pneg %p130
        %p281 = pneg %p154
        %p282 = pneg %p151
        %s283 = smul.u32 4, %s23
        %s284 = smul.u32 64, %s23
        %p286 = scmp.eq.s32.totalorder %s23, 0
        // Predicated region
        $region53: #{tpu_custom_call.1} parent=39 // pred_check
          %p287 = pneg %p286
        $region54: #{tpu_custom_call.1} parent=39 // pred_check_branch
          %289 = sbr.rel (%p287) target = $region56
        $region55: #{tpu_custom_call.1} parent=39 // pred_region
          %290 = vst [vmem:[#allocation2] sm:$0xff] 0.0
        $region56: #{tpu_custom_call.1} parent=39 // pred_fallthru
          _
        %v291 = vld [vmem:[#allocation2] sm:$0xff]
        %v292 = vld [vmem:[%s243] sm:$0xff]
        %v293 = vld [vmem:[%s243 + $0x8] sm:$0xff]
        %v294 = vld [vmem:[%s243 + $0x10] sm:$0xff]
        %v295 = vld [vmem:[%s243 + $0x18] sm:$0xff]
        %v296 = vpack.c.bf16 %v292, %v292
        %v297 = vpack.c.bf16 %v293, %v293
        %v298 = vpack.c.bf16 %v294, %v294
        %v299 = vpack.c.bf16 %v295, %v295
        %v300 = vld [vmem:[%s252] sm:$0xf]
        %v301 = vld [vmem:[%s252 + $0x4] sm:$0xf]
        %v302 = vld [vmem:[%s252 + $0x8] sm:$0xf]
        %v303 = vld [vmem:[%s252 + $0xc] sm:$0xf]
        %v304 = vld [vmem:[%s252 + $0x10] sm:$0xf]
        %v305 = vld [vmem:[%s252 + $0x14] sm:$0xf]
        %v306 = vld [vmem:[%s252 + $0x18] sm:$0xf]
        %v307 = vld [vmem:[%s252 + $0x1c] sm:$0xf]
        %v308 = vld [vmem:[%s252 + $0x20] sm:$0xf]
        %v309 = vld [vmem:[%s252 + $0x24] sm:$0xf]
        %v310 = vld [vmem:[%s252 + $0x28] sm:$0xf]
        %v311 = vld [vmem:[%s252 + $0x2c] sm:$0xf]
        %v312 = vld [vmem:[%s252 + $0x30] sm:$0xf]
        %v313 = vld [vmem:[%s252 + $0x34] sm:$0xf]
        %v314 = vld [vmem:[%s252 + $0x38] sm:$0xf]
        %v315 = vld [vmem:[%s252 + $0x3c] sm:$0xf]
        %v316 = vld [vmem:[%s252 + $0x40] sm:$0xf]
        %v317 = vld [vmem:[%s252 + $0x44] sm:$0xf]
        %v318 = vld [vmem:[%s252 + $0x48] sm:$0xf]
        %v319 = vld [vmem:[%s252 + $0x4c] sm:$0xf]
        %v320 = vld [vmem:[%s252 + $0x50] sm:$0xf]
        %v321 = vld [vmem:[%s252 + $0x54] sm:$0xf]
        %v322 = vld [vmem:[%s252 + $0x58] sm:$0xf]
        %v323 = vld [vmem:[%s252 + $0x5c] sm:$0xf]
        %v324 = vld [vmem:[%s252 + $0x60] sm:$0xf]
        %v325 = vld [vmem:[%s252 + $0x64] sm:$0xf]
        %v326 = vld [vmem:[%s252 + $0x68] sm:$0xf]
        %v327 = vld [vmem:[%s252 + $0x6c] sm:$0xf]
        %v328 = vld [vmem:[%s252 + $0x70] sm:$0xf]
        %v329 = vld [vmem:[%s252 + $0x74] sm:$0xf]
        %v330 = vld [vmem:[%s252 + $0x78] sm:$0xf]
        %v331 = vld [vmem:[%s252 + $0x7c] sm:$0xf]
        %v332 = vld [vmem:[%s252 + $0x80] sm:$0xf]
        %v333 = vld [vmem:[%s252 + $0x84] sm:$0xf]
        %v334 = vld [vmem:[%s252 + $0x88] sm:$0xf]
        %v335 = vld [vmem:[%s252 + $0x8c] sm:$0xf]
        %v336 = vld [vmem:[%s252 + $0x90] sm:$0xf]
        %v337 = vld [vmem:[%s252 + $0x94] sm:$0xf]
        %v338 = vld [vmem:[%s252 + $0x98] sm:$0xf]
        %v339 = vld [vmem:[%s252 + $0x9c] sm:$0xf]
        %v340 = vld [vmem:[%s252 + $0xa0] sm:$0xf]
        %v341 = vld [vmem:[%s252 + $0xa4] sm:$0xf]
        %v342 = vld [vmem:[%s252 + $0xa8] sm:$0xf]
        %v343 = vld [vmem:[%s252 + $0xac] sm:$0xf]
        %v344 = vld [vmem:[%s252 + $0xb0] sm:$0xf]
        %v345 = vld [vmem:[%s252 + $0xb4] sm:$0xf]
        %v346 = vld [vmem:[%s252 + $0xb8] sm:$0xf]
        %v347 = vld [vmem:[%s252 + $0xbc] sm:$0xf]
        %v348 = vld [vmem:[%s252 + $0xc0] sm:$0xf]
        %v349 = vld [vmem:[%s252 + $0xc4] sm:$0xf]
        %v350 = vld [vmem:[%s252 + $0xc8] sm:$0xf]
        %v351 = vld [vmem:[%s252 + $0xcc] sm:$0xf]
        %v352 = vld [vmem:[%s252 + $0xd0] sm:$0xf]
        %v353 = vld [vmem:[%s252 + $0xd4] sm:$0xf]
        %v354 = vld [vmem:[%s252 + $0xd8] sm:$0xf]
        %v355 = vld [vmem:[%s252 + $0xdc] sm:$0xf]
        %v356 = vld [vmem:[%s252 + $0xe0] sm:$0xf]
        %v357 = vld [vmem:[%s252 + $0xe4] sm:$0xf]
        %v358 = vld [vmem:[%s252 + $0xe8] sm:$0xf]
        %v359 = vld [vmem:[%s252 + $0xec] sm:$0xf]
        %v360 = vld [vmem:[%s252 + $0xf0] sm:$0xf]
        %v361 = vld [vmem:[%s252 + $0xf4] sm:$0xf]
        %v362 = vld [vmem:[%s252 + $0xf8] sm:$0xf]
        %v363 = vld [vmem:[%s252 + $0xfc] sm:$0xf]
        %v428 = vunpack.c.l.b16 %v300
        %v429 = vunpack.c.l.b16 %v301
        %v430 = vunpack.c.l.b16 %v302
        %v431 = vunpack.c.l.b16 %v303
        %v432 = vunpack.c.l.b16 %v304
        %v433 = vunpack.c.l.b16 %v305
        %v434 = vunpack.c.l.b16 %v306
        %v435 = vunpack.c.l.b16 %v307
        %v436 = vunpack.c.l.b16 %v308
        %v437 = vunpack.c.l.b16 %v309
        %v438 = vunpack.c.l.b16 %v310
        %v439 = vunpack.c.l.b16 %v311
        %v440 = vunpack.c.l.b16 %v312
        %v441 = vunpack.c.l.b16 %v313
        %v442 = vunpack.c.l.b16 %v314
        %v443 = vunpack.c.l.b16 %v315
        %v444 = vunpack.c.l.b16 %v316
        %v445 = vunpack.c.l.b16 %v317
        %v446 = vunpack.c.l.b16 %v318
        %v447 = vunpack.c.l.b16 %v319
        %v448 = vunpack.c.l.b16 %v320
        %v449 = vunpack.c.l.b16 %v321
        %v450 = vunpack.c.l.b16 %v322
        %v451 = vunpack.c.l.b16 %v323
        %v452 = vunpack.c.l.b16 %v324
        %v453 = vunpack.c.l.b16 %v325
        %v454 = vunpack.c.l.b16 %v326
        %v455 = vunpack.c.l.b16 %v327
        %v456 = vunpack.c.l.b16 %v328
        %v457 = vunpack.c.l.b16 %v329
        %v458 = vunpack.c.l.b16 %v330
        %v459 = vunpack.c.l.b16 %v331
        %v460 = vunpack.c.l.b16 %v332
        %v461 = vunpack.c.l.b16 %v333
        %v462 = vunpack.c.l.b16 %v334
        %v463 = vunpack.c.l.b16 %v335
        %v464 = vunpack.c.l.b16 %v336
        %v465 = vunpack.c.l.b16 %v337
        %v466 = vunpack.c.l.b16 %v338
        %v467 = vunpack.c.l.b16 %v339
        %v468 = vunpack.c.l.b16 %v340
        %v469 = vunpack.c.l.b16 %v341
        %v470 = vunpack.c.l.b16 %v342
        %v471 = vunpack.c.l.b16 %v343
        %v472 = vunpack.c.l.b16 %v344
        %v473 = vunpack.c.l.b16 %v345
        %v474 = vunpack.c.l.b16 %v346
        %v475 = vunpack.c.l.b16 %v347
        %v476 = vunpack.c.l.b16 %v348
        %v477 = vunpack.c.l.b16 %v349
        %v478 = vunpack.c.l.b16 %v350
        %v479 = vunpack.c.l.b16 %v351
        %v480 = vunpack.c.l.b16 %v352
        %v481 = vunpack.c.l.b16 %v353
        %v482 = vunpack.c.l.b16 %v354
        %v483 = vunpack.c.l.b16 %v355
        %v484 = vunpack.c.l.b16 %v356
        %v485 = vunpack.c.l.b16 %v357
        %v486 = vunpack.c.l.b16 %v358
        %v487 = vunpack.c.l.b16 %v359
        %v488 = vunpack.c.l.b16 %v360
        %v489 = vunpack.c.l.b16 %v361
        %v490 = vunpack.c.l.b16 %v362
        %v491 = vunpack.c.l.b16 %v363
        %v492 = vpack.c.b16 %v429, %v428
        %v493 = vpack.c.b16 %v431, %v430
        %v494 = vpack.c.b16 %v433, %v432
        %v495 = vpack.c.b16 %v435, %v434
        %v496 = vpack.c.b16 %v437, %v436
        %v497 = vpack.c.b16 %v439, %v438
        %v498 = vpack.c.b16 %v441, %v440
        %v499 = vpack.c.b16 %v443, %v442
        %v500 = vpack.c.b16 %v445, %v444
        %v501 = vpack.c.b16 %v447, %v446
        %v502 = vpack.c.b16 %v449, %v448
        %v503 = vpack.c.b16 %v451, %v450
        %v504 = vpack.c.b16 %v453, %v452
        %v505 = vpack.c.b16 %v455, %v454
        %v506 = vpack.c.b16 %v457, %v456
        %v507 = vpack.c.b16 %v459, %v458
        %v508 = vpack.c.b16 %v461, %v460
        %v509 = vpack.c.b16 %v463, %v462
        %v510 = vpack.c.b16 %v465, %v464
        %v511 = vpack.c.b16 %v467, %v466
        %v512 = vpack.c.b16 %v469, %v468
        %v513 = vpack.c.b16 %v471, %v470
        %v514 = vpack.c.b16 %v473, %v472
        %v515 = vpack.c.b16 %v475, %v474
        %v516 = vpack.c.b16 %v477, %v476
        %v517 = vpack.c.b16 %v479, %v478
        %v518 = vpack.c.b16 %v481, %v480
        %v519 = vpack.c.b16 %v483, %v482
        %v520 = vpack.c.b16 %v485, %v484
        %v521 = vpack.c.b16 %v487, %v486
        %v522 = vpack.c.b16 %v489, %v488
        %v523 = vpack.c.b16 %v491, %v490
        %556 = vmatprep.subr.bf16.mxu0 0
        %557 = vmatpush1.bf16.msra.mxu0 %v499
        %558 = vmatprep.subr.bf16.mxu0 0
        %559 = vmatpush1.bf16.msra.mxu0 %v498
        %560 = vmatprep.subr.bf16.mxu0 0
        %561 = vmatpush1.bf16.msra.mxu0 %v497
        %562 = vmatprep.subr.bf16.mxu0 0
        %563 = vmatpush1.bf16.msra.mxu0 %v496
        %564 = vmatprep.subr.bf16.mxu0 0
        %565 = vmatpush1.bf16.msra.mxu0 %v495
        %566 = vmatprep.subr.bf16.mxu0 0
        %567 = vmatpush1.bf16.msra.mxu0 %v494
        %568 = vmatprep.subr.bf16.mxu0 0
        %569 = vmatpush1.bf16.msra.mxu0 %v493
        %570 = vmatprep.subr.bf16.mxu0 0
        %571 = vmatpush1.bf16.msra.mxu0 %v492
        %572 = vmatprep.subr.bf16.mxu0 0
        %573 = vmatpush2.bf16.msra.mxu0 %v507
        %574 = vmatprep.subr.bf16.mxu0 0
        %575 = vmatpush2.bf16.msra.mxu0 %v506
        %576 = vmatprep.subr.bf16.mxu0 0
        %577 = vmatpush2.bf16.msra.mxu0 %v505
        %578 = vmatprep.subr.bf16.mxu0 0
        %579 = vmatpush2.bf16.msra.mxu0 %v504
        %580 = vmatprep.subr.bf16.mxu0 0
        %581 = vmatpush2.bf16.msra.mxu0 %v503
        %582 = vmatprep.subr.bf16.mxu0 0
        %583 = vmatpush2.bf16.msra.mxu0 %v502
        %584 = vmatprep.subr.bf16.mxu0 0
        %585 = vmatpush2.bf16.msra.mxu0 %v501
        %586 = vmatprep.subr.bf16.mxu0 0
        %587 = vmatpush2.bf16.msra.mxu0 %v500
        %588 = vmatprep.mubr.bf16.mxu0 %v297
        %589 = vmatmul.mubr.bf16.gmra.mxu0 %v296
        %v590 = vpop.f32.mrf.mxu0
        %v591 = vadd.f32 0.0, %v590
        %v592 = vpop.f32.mrf.mxu0
        %v593 = vpop.f32.mrf.mxu0
        %v594 = vpop.f32.mrf.mxu0
        %595 = vdwg.mxu0
        %596 = vmatprep.subr.bf16.mxu0 0
        %597 = vmatpush1.bf16.msra.mxu0 %v515
        %598 = vmatprep.subr.bf16.mxu0 0
        %599 = vmatpush1.bf16.msra.mxu0 %v514
        %600 = vmatprep.subr.bf16.mxu0 0
        %601 = vmatpush1.bf16.msra.mxu0 %v513
        %602 = vmatprep.subr.bf16.mxu0 0
        %603 = vmatpush1.bf16.msra.mxu0 %v512
        %604 = vmatprep.subr.bf16.mxu0 0
        %605 = vmatpush1.bf16.msra.mxu0 %v511
        %606 = vmatprep.subr.bf16.mxu0 0
        %607 = vmatpush1.bf16.msra.mxu0 %v510
        %608 = vmatprep.subr.bf16.mxu0 0
        %609 = vmatpush1.bf16.msra.mxu0 %v509
        %610 = vmatprep.subr.bf16.mxu0 0
        %611 = vmatpush1.bf16.msra.mxu0 %v508
        %612 = vmatprep.subr.bf16.mxu0 0
        %613 = vmatpush2.bf16.msra.mxu0 %v523
        %614 = vmatprep.subr.bf16.mxu0 0
        %615 = vmatpush2.bf16.msra.mxu0 %v522
        %616 = vmatprep.subr.bf16.mxu0 0
        %617 = vmatpush2.bf16.msra.mxu0 %v521
        %618 = vmatprep.subr.bf16.mxu0 0
        %619 = vmatpush2.bf16.msra.mxu0 %v520
        %620 = vmatprep.subr.bf16.mxu0 0
        %621 = vmatpush2.bf16.msra.mxu0 %v519
        %622 = vmatprep.subr.bf16.mxu0 0
        %623 = vmatpush2.bf16.msra.mxu0 %v518
        %624 = vmatprep.subr.bf16.mxu0 0
        %625 = vmatpush2.bf16.msra.mxu0 %v517
        %626 = vmatprep.subr.bf16.mxu0 0
        %627 = vmatpush2.bf16.msra.mxu0 %v516
        %628 = vmatprep.mubr.bf16.mxu0 %v299
        %629 = vmatmul.mubr.bf16.gmra.mxu0 %v298
        %v630 = vpop.f32.mrf.mxu0
        %v631 = vadd.f32 %v591, %v630
        %v632 = vpop.f32.mrf.mxu0
        %v633 = vpop.f32.mrf.mxu0
        %v634 = vpop.f32.mrf.mxu0
        %635 = vdwg.mxu0
        %v636 = vadd.f32 %v291, %v631
        %637 = vst [vmem:[#allocation2] sm:$0xff] %v636
        %p638 = scmp.eq.s32.totalorder %s23, 1
        // Predicated region
        $region57: #{tpu_custom_call.1} parent=39 // pred_check
          %p639 = pneg %p638
        $region58: #{tpu_custom_call.1} parent=39 // pred_check_branch
          %641 = sbr.rel (%p639) target = $region60
        $region59: #{tpu_custom_call.1} parent=39 // pred_region
          %v642 = vld [vmem:[#allocation2] sm:$0xff]
          %v643 = vld [vmem:[%s2] sm:$0x1]
          %v645 = vlaneseq
          %v646 = vshrl.u32 %v645, 7
          %v647 = vsub.s32 0, %v646
          %v648 = vrot.slane %v643, %v647
          %v650 = vadd.f32 %v642, %v648
          %v651 = vmax.f32 %v650, 0.0
          %v652 = vpack.c.bf16 %v651, %v651
          %v653 = vld [vmem:[#allocation8] sm:$0xf]
          %v654 = vld [vmem:[#allocation8 + $0x4] sm:$0xf]
          %v655 = vld [vmem:[#allocation8 + $0x8] sm:$0xf]
          %v656 = vld [vmem:[#allocation8 + $0xc] sm:$0xf]
          %v657 = vld [vmem:[#allocation8 + $0x10] sm:$0xf]
          %v658 = vld [vmem:[#allocation8 + $0x14] sm:$0xf]
          %v659 = vld [vmem:[#allocation8 + $0x18] sm:$0xf]
          %v660 = vld [vmem:[#allocation8 + $0x1c] sm:$0xf]
          %v661 = vld [vmem:[#allocation8 + $0x20] sm:$0xf]
          %v662 = vld [vmem:[#allocation8 + $0x24] sm:$0xf]
          %v663 = vld [vmem:[#allocation8 + $0x28] sm:$0xf]
          %v664 = vld [vmem:[#allocation8 + $0x2c] sm:$0xf]
          %v665 = vld [vmem:[#allocation8 + $0x30] sm:$0xf]
          %v666 = vld [vmem:[#allocation8 + $0x34] sm:$0xf]
          %v667 = vld [vmem:[#allocation8 + $0x38] sm:$0xf]
          %v668 = vld [vmem:[#allocation8 + $0x3c] sm:$0xf]
          %v669 = vld [vmem:[%s4] sm:$0x1]
          %v671 = vlaneseq
          %v672 = vshrl.u32 %v671, 7
          %v673 = vsub.s32 0, %v672
          %v674 = vrot.slane %v669, %v673
          %v692 = vunpack.c.l.b16 %v653
          %v693 = vunpack.c.l.b16 %v654
          %v694 = vunpack.c.l.b16 %v655
          %v695 = vunpack.c.l.b16 %v656
          %v696 = vunpack.c.l.b16 %v657
          %v697 = vunpack.c.l.b16 %v658
          %v698 = vunpack.c.l.b16 %v659
          %v699 = vunpack.c.l.b16 %v660
          %v700 = vunpack.c.l.b16 %v661
          %v701 = vunpack.c.l.b16 %v662
          %v702 = vunpack.c.l.b16 %v663
          %v703 = vunpack.c.l.b16 %v664
          %v704 = vunpack.c.l.b16 %v665
          %v705 = vunpack.c.l.b16 %v666
          %v706 = vunpack.c.l.b16 %v667
          %v707 = vunpack.c.l.b16 %v668
          %v708 = vpack.c.b16 %v693, %v692
          %v709 = vpack.c.b16 %v695, %v694
          %v710 = vpack.c.b16 %v697, %v696
          %v711 = vpack.c.b16 %v699, %v698
          %v712 = vpack.c.b16 %v701, %v700
          %v713 = vpack.c.b16 %v703, %v702
          %v714 = vpack.c.b16 %v705, %v704
          %v715 = vpack.c.b16 %v707, %v706
          %724 = vmatprep.subr.bf16.mxu0 0
          %725 = vmatpush1.bf16.msra.mxu0 %v715
          %726 = vmatprep.subr.bf16.mxu0 0
          %727 = vmatpush1.bf16.msra.mxu0 %v714
          %728 = vmatprep.subr.bf16.mxu0 0
          %729 = vmatpush1.bf16.msra.mxu0 %v713
          %730 = vmatprep.subr.bf16.mxu0 0
          %731 = vmatpush1.bf16.msra.mxu0 %v712
          %732 = vmatprep.subr.bf16.mxu0 0
          %733 = vmatpush1.bf16.msra.mxu0 %v711
          %734 = vmatprep.subr.bf16.mxu0 0
          %735 = vmatpush1.bf16.msra.mxu0 %v710
          %736 = vmatprep.subr.bf16.mxu0 0
          %737 = vmatpush1.bf16.msra.mxu0 %v709
          %738 = vmatprep.subr.bf16.mxu0 0
          %739 = vmatpush1.bf16.msra.mxu0 %v708
          %740 = vmatprep.subr.bf16.mxu0 0
          %741 = vmatpush2.bf16.msra.mxu0 0
          %742 = vmatprep.subr.bf16.mxu0 0
          %743 = vmatpush2.bf16.msra.mxu0 0
          %744 = vmatprep.subr.bf16.mxu0 0
          %745 = vmatpush2.bf16.msra.mxu0 0
          %746 = vmatprep.subr.bf16.mxu0 0
          %747 = vmatpush2.bf16.msra.mxu0 0
          %748 = vmatprep.subr.bf16.mxu0 0
          %749 = vmatpush2.bf16.msra.mxu0 0
          %750 = vmatprep.subr.bf16.mxu0 0
          %751 = vmatpush2.bf16.msra.mxu0 0
          %752 = vmatprep.subr.bf16.mxu0 0
          %753 = vmatpush2.bf16.msra.mxu0 0
          %754 = vmatprep.subr.bf16.mxu0 0
          %755 = vmatpush2.bf16.msra.mxu0 0
          %756 = vmatprep.mubr.bf16.mxu0 0
          %757 = vmatmul.mubr.bf16.gmra.mxu0 %v652
          %v758 = vpop.f32.mrf.mxu0
          %v759 = vadd.f32 %v674, %v758
          %v760 = vpop.f32.mrf.mxu0
          %v761 = vpop.f32.mrf.mxu0
          %v762 = vpop.f32.mrf.mxu0
          %763 = vdwg.mxu0
          %764 = vst [vmem:[#allocation9] sm:$0xff] %v759
          %765 = vst [vmem:[#allocation9 + $0x8] sm:$0xff] %v759
          %766 = vst [vmem:[#allocation9 + $0x10] sm:$0xff] %v759
          %767 = vst [vmem:[#allocation9 + $0x18] sm:$0xff] %v759
        $region60: #{tpu_custom_call.1} parent=39 // pred_fallthru
          _
        // Predicated region
        $region61: #{tpu_custom_call.1} parent=39 // pred_check
          %p768 = pneg %p151
        $region62: #{tpu_custom_call.1} parent=39 // pred_check_branch
          %770 = sbr.rel (%p768) target = $region64
        $region63: #{tpu_custom_call.1} parent=39 // pred_region
          %s772 = ssub.s32 512, 512
          %773 = vsyncadd [#allocation5], %s772
          %s774 = sshll.u32 [#allocation9], 4
          %s775 = int_to_ptr.vmem [resolvable:$true] %s774
          %780 = dma.vmem_to_hbm [thread:$0]  %s775, 512, %s5, [#allocation5], 128, 128, 8
        $region64: #{tpu_custom_call.1} parent=39 // pred_fallthru
          _
        // Predicated region
        $region65: #{tpu_custom_call.1} parent=39 // pred_check
          %p781 = pneg %p151
        $region66: #{tpu_custom_call.1} parent=39 // pred_check_branch
          %783 = sbr.rel (%p781) target = $region68
        $region67: #{tpu_custom_call.1} parent=39 // pred_region
          %784 = dma.done [#allocation5], 512
        $region68: #{tpu_custom_call.1} parent=39 // pred_fallthru
          _
      $region40: #{tpu_custom_call.1} parent=5 // pred_fallthru
        _
      %p785 = scmp.le.s32.totalorder 2, %s18
      // Predicated region
      $region69: #{tpu_custom_call.1} parent=5 // pred_check
        %p786 = pneg %p785
      $region70: #{tpu_custom_call.1} parent=5 // pred_check_branch
        %788 = sbr.rel (%p786) target = $region72
      $region71: #{tpu_custom_call.1} parent=5 // pred_region
        %s789 = ssub.s32 %s18, 2
      $region72: #{tpu_custom_call.1} parent=5 // pred_fallthru
        _
    $region6: #{tpu_custom_call.1} parent=1 // loop_footer
      %s22 = sadd.s32 1, %s18
    $region7: #{tpu_custom_call.1} parent=1 // loop_footer_branch
      %17 = sbr.rel target = $region3
    $region8: #{tpu_custom_call.1} parent=1 // loop_exit
      _
    %790 = vsyncpa [#allocation4], 1
    %s791 = scalar_lea.sflag [#allocation4], 1
    %792 = vsyncpa %s791, 1
    %793 = vsyncpa [#allocation7], 1
    %s794 = scalar_lea.sflag [#allocation7], 1
    %795 = vsyncpa %s794, 1
    %796 = vsyncpa [#allocation5], 1
    %s797 = scalar_lea.sflag [#allocation5], 1
    %798 = vsyncpa %s797, 1

</llo_original>
